<compile_context>
chip_gen: v6e
topology: v6e:2x2x1
jax: 0.10.0
libtpu: 0.0.40
codegen_flags: <defaults>
</compile_context>

<pallas_src>
import numpy as np
import jax
import jax.numpy as jnp
from jax.experimental import pallas as pl
from jax.experimental.pallas import tpu as pltpu


# ---------------------------------------------------------------------------
# Precomputed stencil data (numpy, built once per shape in the wrapper).
# ---------------------------------------------------------------------------

def _gradient_matrix(n):
    """torch.gradient (unit spacing, edge_order=1) along a length-n axis as a
    dense (n, n) operator: (G @ v)[i] = dv/di.  Valid for n >= 2."""
    g = np.zeros((n, n), dtype=np.float32)
    g[0, 0], g[0, 1] = -1.0, 1.0
    g[n - 1, n - 2], g[n - 1, n - 1] = -1.0, 1.0
    for i in range(1, n - 1):
        g[i, i - 1], g[i, i + 1] = -0.5, 0.5
    return g


def _sublane_gradient_coeffs(d, h):
    """Per-row weights (a, b, c) so that the H-axis torch.gradient of the
    plane-major (d*h, w) view is a*roll(x,-1) + b*x + c*roll(x,+1).
    Rows with i==0 / i==h-1 use one-sided weights; the weight of the wrapped
    (cross-plane) neighbour is exactly 0, so roll wrap-around is harmless."""
    i = np.arange(d * h) % h
    a = np.where(i == 0, 1.0, np.where(i == h - 1, 0.0, 0.5))
    b = np.where(i == 0, -1.0, np.where(i == h - 1, 1.0, 0.0))
    c = np.where(i == 0, 0.0, np.where(i == h - 1, -1.0, -0.5))
    as_col = lambda v: v.reshape(-1, 1).astype(np.float32)
    return as_col(a), as_col(b), as_col(c)                      # (d*h, 1) each


# ---------------------------------------------------------------------------
# Kernel
# ---------------------------------------------------------------------------

def _make_bending_kernel(d, h):
    """Kernel over one displacement component, viewed as (d*h, w)."""

    def _grad_d(v):
        # torch.gradient along the leading (D) axis: shifted row-slices move
        # whole (h, w) planes -> tile aligned whenever h % 8 == 0.
        left = v[h:2 * h] - v[0:h]                              # d = 0
        right = v[(d - 1) * h:d * h] - v[(d - 2) * h:(d - 1) * h]  # d = D-1
        if d == 2:
            return jnp.concatenate([left, right], axis=0)
        interior = 0.5 * (v[2 * h:] - v[:(d - 2) * h])          # d = 1..D-2
        return jnp.concatenate([left, interior, right], axis=0)

    def kernel(x_ref, ha_ref, hb_ref, hc_ref, gw1_ref, gw2_ref, out_ref):
        x = x_ref[...].astype(jnp.float32)                      # (d*h, w)
        a = ha_ref[...]                                         # (d*h, 1)
        b = hb_ref[...]
        c = hc_ref[...]
        gw1 = gw1_ref[...]                                      # (w, w)  G^T
        gw2 = gw2_ref[...]                                      # (w, w)  (G@G)^T

        def grad_h(v):
            nxt = pltpu.roll(v, shift=d * h - 1, axis=0)        # v[i+1] (wrap x 0)
            prv = pltpu.roll(v, shift=1, axis=0)                # v[i-1] (wrap x 0)
            return a * nxt + b * v + c * prv

        def grad_w(v, stencil_t):
            # Lane-axis derivative on the (otherwise idle) MXU.
            return jnp.dot(v, stencil_t, preferred_element_type=jnp.float32)

        # --- stream 1: dx = d/dD ------------------------------------------
        dx = _grad_d(x)
        t = _grad_d(dx)
        acc_diag = t * t                                        # dxx^2
        t = grad_h(dx)
        acc_mix = t * t                                         # dxy^2
        t = grad_w(dx, gw1)
        acc_mix = acc_mix + t * t                               # dxz^2
        # dx dead from here on -> keeps peak live temporaries low

        # --- stream 2: dy = d/dH ------------------------------------------
        dy = grad_h(x)
        t = grad_h(dy)
        acc_diag = acc_diag + t * t                             # dyy^2
        t = grad_w(dy, gw1)
        acc_mix = acc_mix + t * t                               # dyz^2

        # --- stream 3: dzz via the precomposed (G @ G) stencil -------------
        t = grad_w(x, gw2)
        acc_diag = acc_diag + t * t                             # dzz^2

        # 2x on mixed terms applied to the reduced scalar, not per element.
        total = jnp.sum(acc_diag) + 2.0 * jnp.sum(acc_mix)
        # Lane-dense, unmasked per-program output block (no iota/where).
        out_ref[...] = jnp.broadcast_to(total, out_ref.shape)

    return kernel


# ---------------------------------------------------------------------------
# Wrapper
# ---------------------------------------------------------------------------

def _vmem_budget_bytes(rows, w, in_itemsize):
    vol_f32 = rows * w * 4
    need = (2 * rows * w * in_itemsize   # double-buffered input block
            + 12 * vol_f32               # peak live f32 temporaries (x, dx/dy,
                                         # acc_diag, acc_mix, derivative temp,
                                         # roll operands, slack)
            + 6 * rows * 4               # double-buffered H coefficient columns
            + 4 * w * w * 4              # double-buffered (W, W) stencils
            + (8 << 20))                 # Mosaic internal-scratch headroom
    # No floor; stay well under v7x's 64 MiB per-TensorCore VMEM (>12% headroom).
    return int(min(need, 56 << 20))


def bending_energy(displacement, weight=0.01):
    """Pallas implementation of BendingEnergy.forward.

    displacement: float[B, 3, D, H, W]  ->  scalar f32 loss.
    """
    if displacement.ndim != 5:
        raise ValueError(f"expected [B, 3, D, H, W], got {displacement.shape}")
    B, C, D, H, W = displacement.shape
    if min(D, H, W) < 2:
        raise ValueError(
            f"BendingEnergy needs every spatial extent >= 2, got ({D},{H},{W})")

    # Lane-dense layout: the bending energy is invariant under permutations of
    # the spatial axes (discrete gradient operators along different axes
    # commute), so put the largest extent on the lane axis and the middle one
    # on the sublane axis.  No-op when the input is already ordered.
    order = tuple(int(i) for i in np.argsort([D, H, W], kind="stable"))
    if order != (0, 1, 2):
        displacement = jnp.transpose(
            displacement, (0, 1, 2 + order[0], 2 + order[1], 2 + order[2]))
        D, H, W = displacement.shape[2:]

    n_vol = B * C
    rows = D * H
    x = displacement.reshape(n_vol, rows, W)   # free reshape, no dtype copy

    ha, hb, hc = (jnp.asarray(v) for v in _sublane_gradient_coeffs(D, H))
    g = _gradient_matrix(W)
    gw1_t = jnp.asarray(np.ascontiguousarray(g.T))              # (W, W)
    gw2_t = jnp.asarray(np.ascontiguousarray((g @ g).T))        # (W, W)

    kernel = _make_bending_kernel(D, H)
    in_itemsize = jnp.dtype(displacement.dtype).itemsize

    partials = pl.pallas_call(
        kernel,
        out_shape=jax.ShapeDtypeStruct((n_vol, 8, 128), jnp.float32),
        grid=(n_vol,),
        in_specs=[
            pl.BlockSpec((None, rows, W), lambda i: (i, 0, 0)),  # one volume
            pl.BlockSpec((rows, 1), lambda i: (0, 0)),           # H coeff a
            pl.BlockSpec((rows, 1), lambda i: (0, 0)),           # H coeff b
            pl.BlockSpec((rows, 1), lambda i: (0, 0)),           # H coeff c
            pl.BlockSpec((W, W), lambda i: (0, 0)),              # W grad stencil
            pl.BlockSpec((W, W), lambda i: (0, 0)),              # W 2nd-deriv stencil
        ],
        out_specs=pl.BlockSpec((1, 8, 128), lambda i: (i, 0, 0)),
        compiler_params=pltpu.CompilerParams(
            dimension_semantics=("parallel",),
            vmem_limit_bytes=_vmem_budget_bytes(rows, W, in_itemsize)),
    )(x, ha, hb, hc, gw1_t, gw2_t)

    total = jnp.sum(partials[:, 0, 0], dtype=jnp.float32)
    mean = total / jnp.float32(n_vol * rows * W)
    return jnp.float32(weight) * mean


# ---------------------------------------------------------------------------
# Plain-JAX reference (torch.gradient semantics) and self-test
# ---------------------------------------------------------------------------

def _reference_bending_energy(d, weight=0.01):
    def g(a, axis):
        r = jnp.gradient(a, axis=axis)
        return r[0] if isinstance(r, (list, tuple)) else r

    dx, dy, dz = g(d, 2), g(d, 3), g(d, 4)
    dxx, dyy, dzz = g(dx, 2), g(dy, 3), g(dz, 4)
    dxy, dxz, dyz = g(dx, 3), g(dx, 4), g(dy, 4)
    b = (dxx ** 2 + dyy ** 2 + dzz ** 2
         + 2 * dxy ** 2 + 2 * dxz ** 2 + 2 * dyz ** 2)
    return weight * b.mean()


if __name__ == "__main__":
    key = jax.random.PRNGKey(0)
    k1, k2 = jax.random.split(key)

    # Test 1: lane-friendly layout (H=8 = one sublane tile, W=128 = full lane
    # width).  Values are kept exactly bf16-representable so the MXU stencil
    # matmuls agree with the f32 reference to summation-order noise.
    d1 = jax.random.normal(k1, (2, 3, 8, 8, 128), dtype=jnp.float32)
    d1 = d1.astype(jnp.bfloat16).astype(jnp.float32)
    out1 = jax.block_until_ready(bending_energy(d1, weight=0.01))
    ref1 = jax.block_until_ready(_reference_bending_energy(d1, weight=0.01))
    assert abs(float(out1) - float(ref1)) <= 1e-3 * max(abs(float(ref1)), 1e-6), (
        float(out1), float(ref1))

    # Test 2: bf16 input in an unfriendly orientation (largest extent first);
    # the wrapper permutes the spatial axes so the lane axis gets the largest
    # extent and the kernel upcasts in VMEM.
    d2 = jax.random.normal(k2, (1, 3, 32, 8, 16), dtype=jnp.float32)
    d2 = d2.astype(jnp.bfloat16)
    out2 = jax.block_until_ready(bending_energy(d2, weight=0.01))
    ref2 = jax.block_until_ready(
        _reference_bending_energy(d2.astype(jnp.float32), weight=0.01))
    assert abs(float(out2) - float(ref2)) <= 1e-3 * max(abs(float(ref2)), 1e-6), (
        float(out2), float(ref2))

    print("KERNEL_OK")
</pallas_src>

<mosaic_0001>
module attributes {stable_mosaic.version = 11 : i64} {
  func.func @kernel(%arg0: i32, %arg1: memref<1x64x128xf32, #tpu.memory_space<vmem>>, %arg2: memref<64x1xf32, #tpu.memory_space<vmem>>, %arg3: memref<64x1xf32, #tpu.memory_space<vmem>>, %arg4: memref<64x1xf32, #tpu.memory_space<vmem>>, %arg5: memref<128x128xf32, #tpu.memory_space<vmem>>, %arg6: memref<128x128xf32, #tpu.memory_space<vmem>>, %arg7: memref<1x8x128xf32, #tpu.memory_space<vmem>>) attributes {dimension_semantics = [#tpu.dimension_semantics<parallel>], iteration_bounds = array<i64: 6>, scalar_prefetch = 0 : i64, scratch_operands = 0 : i64, tpu.core_type = #tpu.core_type<tc>, window_params = [{transform_indices = @transform_0, window_bounds = array<i64: 1, 64, 128>}, {pipeline_mode = #tpu.pipeline_mode<synchronous>, transform_indices = @transform_1, window_bounds = array<i64: 64, 1>}, {pipeline_mode = #tpu.pipeline_mode<synchronous>, transform_indices = @transform_2, window_bounds = array<i64: 64, 1>}, {pipeline_mode = #tpu.pipeline_mode<synchronous>, transform_indices = @transform_3, window_bounds = array<i64: 64, 1>}, {pipeline_mode = #tpu.pipeline_mode<synchronous>, transform_indices = @transform_4, window_bounds = array<i64: 128, 128>}, {pipeline_mode = #tpu.pipeline_mode<synchronous>, transform_indices = @transform_5, window_bounds = array<i64: 128, 128>}, {transform_indices = @transform_6, window_bounds = array<i64: 1, 8, 128>}]} {
    %c0 = arith.constant 0 : index
    %c0_0 = arith.constant 0 : index
    %c0_1 = arith.constant 0 : index
    %0 = vector.load %arg1[%c0, %c0_0, %c0_1] : memref<1x64x128xf32, #tpu.memory_space<vmem>>, vector<1x64x128xf32>
    %1 = vector.shape_cast %0 : vector<1x64x128xf32> to vector<64x128xf32>
    %c0_2 = arith.constant 0 : index
    %c0_3 = arith.constant 0 : index
    %2 = vector.load %arg2[%c0_2, %c0_3] : memref<64x1xf32, #tpu.memory_space<vmem>>, vector<64x1xf32>
    %c0_4 = arith.constant 0 : index
    %c0_5 = arith.constant 0 : index
    %3 = vector.load %arg3[%c0_4, %c0_5] : memref<64x1xf32, #tpu.memory_space<vmem>>, vector<64x1xf32>
    %c0_6 = arith.constant 0 : index
    %c0_7 = arith.constant 0 : index
    %4 = vector.load %arg4[%c0_6, %c0_7] : memref<64x1xf32, #tpu.memory_space<vmem>>, vector<64x1xf32>
    %c0_8 = arith.constant 0 : index
    %c0_9 = arith.constant 0 : index
    %5 = vector.load %arg5[%c0_8, %c0_9] : memref<128x128xf32, #tpu.memory_space<vmem>>, vector<128x128xf32>
    %c0_10 = arith.constant 0 : index
    %c0_11 = arith.constant 0 : index
    %6 = vector.load %arg6[%c0_10, %c0_11] : memref<128x128xf32, #tpu.memory_space<vmem>>, vector<128x128xf32>
    %7 = vector.extract_strided_slice %1 {offsets = [8, 0], sizes = [8, 128], strides = [1, 1]} : vector<64x128xf32> to vector<8x128xf32>
    %8 = vector.extract_strided_slice %1 {offsets = [0, 0], sizes = [8, 128], strides = [1, 1]} : vector<64x128xf32> to vector<8x128xf32>
    %9 = arith.subf %7, %8 : vector<8x128xf32>
    %10 = vector.extract_strided_slice %1 {offsets = [56, 0], sizes = [8, 128], strides = [1, 1]} : vector<64x128xf32> to vector<8x128xf32>
    %11 = vector.extract_strided_slice %1 {offsets = [48, 0], sizes = [8, 128], strides = [1, 1]} : vector<64x128xf32> to vector<8x128xf32>
    %12 = arith.subf %10, %11 : vector<8x128xf32>
    %13 = vector.extract_strided_slice %1 {offsets = [16, 0], sizes = [48, 128], strides = [1, 1]} : vector<64x128xf32> to vector<48x128xf32>
    %14 = vector.extract_strided_slice %1 {offsets = [0, 0], sizes = [48, 128], strides = [1, 1]} : vector<64x128xf32> to vector<48x128xf32>
    %15 = arith.subf %13, %14 : vector<48x128xf32>
    %cst = arith.constant 5.000000e-01 : f32
    %16 = vector.broadcast %cst : f32 to vector<48x128xf32>
    %17 = arith.mulf %16, %15 : vector<48x128xf32>
    %18 = tpu.concatenate %9, %17, %12 in 0 : vector<8x128xf32>, vector<48x128xf32>, vector<8x128xf32> -> vector<64x128xf32>
    %19 = vector.extract_strided_slice %18 {offsets = [8, 0], sizes = [8, 128], strides = [1, 1]} : vector<64x128xf32> to vector<8x128xf32>
    %20 = vector.extract_strided_slice %18 {offsets = [0, 0], sizes = [8, 128], strides = [1, 1]} : vector<64x128xf32> to vector<8x128xf32>
    %21 = arith.subf %19, %20 : vector<8x128xf32>
    %22 = vector.extract_strided_slice %18 {offsets = [56, 0], sizes = [8, 128], strides = [1, 1]} : vector<64x128xf32> to vector<8x128xf32>
    %23 = vector.extract_strided_slice %18 {offsets = [48, 0], sizes = [8, 128], strides = [1, 1]} : vector<64x128xf32> to vector<8x128xf32>
    %24 = arith.subf %22, %23 : vector<8x128xf32>
    %25 = vector.extract_strided_slice %18 {offsets = [16, 0], sizes = [48, 128], strides = [1, 1]} : vector<64x128xf32> to vector<48x128xf32>
    %26 = vector.extract_strided_slice %18 {offsets = [0, 0], sizes = [48, 128], strides = [1, 1]} : vector<64x128xf32> to vector<48x128xf32>
    %27 = arith.subf %25, %26 : vector<48x128xf32>
    %cst_12 = arith.constant 5.000000e-01 : f32
    %28 = vector.broadcast %cst_12 : f32 to vector<48x128xf32>
    %29 = arith.mulf %28, %27 : vector<48x128xf32>
    %30 = tpu.concatenate %21, %29, %24 in 0 : vector<8x128xf32>, vector<48x128xf32>, vector<8x128xf32> -> vector<64x128xf32>
    %31 = arith.mulf %30, %30 : vector<64x128xf32>
    %c63_i32 = arith.constant 63 : i32
    %32 = tpu.dynamic_rotate %18 by %c63_i32 dim 0 : vector<64x128xf32>, i32 -> vector<64x128xf32>
    %c1_i32 = arith.constant 1 : i32
    %33 = tpu.dynamic_rotate %18 by %c1_i32 dim 0 : vector<64x128xf32>, i32 -> vector<64x128xf32>
    %34 = vector.broadcast %2 : vector<64x1xf32> to vector<64x128xf32>
    %35 = arith.mulf %34, %32 : vector<64x128xf32>
    %36 = vector.broadcast %3 : vector<64x1xf32> to vector<64x128xf32>
    %37 = arith.mulf %36, %18 : vector<64x128xf32>
    %38 = arith.addf %35, %37 : vector<64x128xf32>
    %39 = vector.broadcast %4 : vector<64x1xf32> to vector<64x128xf32>
    %40 = arith.mulf %39, %33 : vector<64x128xf32>
    %41 = arith.addf %38, %40 : vector<64x128xf32>
    %42 = arith.mulf %41, %41 : vector<64x128xf32>
    %cst_13 = arith.constant dense<0.000000e+00> : vector<64x128xf32>
    %43 = tpu.matmul %18, %5, %cst_13 {dimension_numbers = #tpu.dot_dimension_numbers<[1], [0], [0], [1], [0, 0, 1, 1], [], []>} : vector<64x128xf32>, vector<128x128xf32>, vector<64x128xf32> -> vector<64x128xf32>
    %44 = arith.mulf %43, %43 : vector<64x128xf32>
    %45 = arith.addf %42, %44 : vector<64x128xf32>
    %c63_i32_14 = arith.constant 63 : i32
    %46 = tpu.dynamic_rotate %1 by %c63_i32_14 dim 0 : vector<64x128xf32>, i32 -> vector<64x128xf32>
    %c1_i32_15 = arith.constant 1 : i32
    %47 = tpu.dynamic_rotate %1 by %c1_i32_15 dim 0 : vector<64x128xf32>, i32 -> vector<64x128xf32>
    %48 = vector.broadcast %2 : vector<64x1xf32> to vector<64x128xf32>
    %49 = arith.mulf %48, %46 : vector<64x128xf32>
    %50 = vector.broadcast %3 : vector<64x1xf32> to vector<64x128xf32>
    %51 = arith.mulf %50, %1 : vector<64x128xf32>
    %52 = arith.addf %49, %51 : vector<64x128xf32>
    %53 = vector.broadcast %4 : vector<64x1xf32> to vector<64x128xf32>
    %54 = arith.mulf %53, %47 : vector<64x128xf32>
    %55 = arith.addf %52, %54 : vector<64x128xf32>
    %c63_i32_16 = arith.constant 63 : i32
    %56 = tpu.dynamic_rotate %55 by %c63_i32_16 dim 0 : vector<64x128xf32>, i32 -> vector<64x128xf32>
    %c1_i32_17 = arith.constant 1 : i32
    %57 = tpu.dynamic_rotate %55 by %c1_i32_17 dim 0 : vector<64x128xf32>, i32 -> vector<64x128xf32>
    %58 = vector.broadcast %2 : vector<64x1xf32> to vector<64x128xf32>
    %59 = arith.mulf %58, %56 : vector<64x128xf32>
    %60 = vector.broadcast %3 : vector<64x1xf32> to vector<64x128xf32>
    %61 = arith.mulf %60, %55 : vector<64x128xf32>
    %62 = arith.addf %59, %61 : vector<64x128xf32>
    %63 = vector.broadcast %4 : vector<64x1xf32> to vector<64x128xf32>
    %64 = arith.mulf %63, %57 : vector<64x128xf32>
    %65 = arith.addf %62, %64 : vector<64x128xf32>
    %66 = arith.mulf %65, %65 : vector<64x128xf32>
    %67 = arith.addf %31, %66 : vector<64x128xf32>
    %cst_18 = arith.constant dense<0.000000e+00> : vector<64x128xf32>
    %68 = tpu.matmul %55, %5, %cst_18 {dimension_numbers = #tpu.dot_dimension_numbers<[1], [0], [0], [1], [0, 0, 1, 1], [], []>} : vector<64x128xf32>, vector<128x128xf32>, vector<64x128xf32> -> vector<64x128xf32>
    %69 = arith.mulf %68, %68 : vector<64x128xf32>
    %70 = arith.addf %45, %69 : vector<64x128xf32>
    %cst_19 = arith.constant dense<0.000000e+00> : vector<64x128xf32>
    %71 = tpu.matmul %1, %6, %cst_19 {dimension_numbers = #tpu.dot_dimension_numbers<[1], [0], [0], [1], [0, 0, 1, 1], [], []>} : vector<64x128xf32>, vector<128x128xf32>, vector<64x128xf32> -> vector<64x128xf32>
    %72 = arith.mulf %71, %71 : vector<64x128xf32>
    %73 = arith.addf %67, %72 : vector<64x128xf32>
    %74 = vector.shape_cast %73 : vector<64x128xf32> to vector<1x64x128xf32>
    %cst_20 = arith.constant dense<0.000000e+00> : vector<1xf32>
    %75 = vector.multi_reduction <add>, %74, %cst_20 [1, 2] : vector<1x64x128xf32> to vector<1xf32>
    %76 = vector.shape_cast %75 : vector<1xf32> to vector<1x1x1xf32>
    %77 = vector.extract %76[0, 0, 0] : f32 from vector<1x1x1xf32>
    %78 = vector.shape_cast %70 : vector<64x128xf32> to vector<1x64x128xf32>
    %cst_21 = arith.constant dense<0.000000e+00> : vector<1xf32>
    %79 = vector.multi_reduction <add>, %78, %cst_21 [1, 2] : vector<1x64x128xf32> to vector<1xf32>
    %80 = vector.shape_cast %79 : vector<1xf32> to vector<1x1x1xf32>
    %81 = vector.extract %80[0, 0, 0] : f32 from vector<1x1x1xf32>
    %cst_22 = arith.constant 2.000000e+00 : f32
    %82 = arith.mulf %cst_22, %81 : f32
    %83 = arith.addf %77, %82 : f32
    %84 = vector.broadcast %83 : f32 to vector<1x8x128xf32>
    %c0_23 = arith.constant 0 : index
    %c0_24 = arith.constant 0 : index
    %c0_25 = arith.constant 0 : index
    %85 = vector.load %arg7[%c0_23, %c0_24, %c0_25] : memref<1x8x128xf32, #tpu.memory_space<vmem>>, vector<1x8x128xf32>
    tpu.vector_store %arg7[%c0_23, %c0_24, %c0_25], %84 {strides = array<i32>} : memref<1x8x128xf32, #tpu.memory_space<vmem>>, vector<1x8x128xf32>,
    return
  }
  func.func @transform_0(%arg0: i32) -> (i32, i32, i32) {
    %c0_i32 = arith.constant 0 : i32
    %c0_i32_0 = arith.constant 0 : i32
    %c0_i32_1 = arith.constant 0 : i32
    return %arg0, %c0_i32, %c0_i32_0 : i32, i32, i32
  }
  func.func @transform_1(%arg0: i32) -> (i32, i32) {
    %c0_i32 = arith.constant 0 : i32
    %c0_i32_0 = arith.constant 0 : i32
    %c0_i32_1 = arith.constant 0 : i32
    return %c0_i32, %c0_i32_0 : i32, i32
  }
  func.func @transform_2(%arg0: i32) -> (i32, i32) {
    %c0_i32 = arith.constant 0 : i32
    %c0_i32_0 = arith.constant 0 : i32
    %c0_i32_1 = arith.constant 0 : i32
    return %c0_i32, %c0_i32_0 : i32, i32
  }
  func.func @transform_3(%arg0: i32) -> (i32, i32) {
    %c0_i32 = arith.constant 0 : i32
    %c0_i32_0 = arith.constant 0 : i32
    %c0_i32_1 = arith.constant 0 : i32
    return %c0_i32, %c0_i32_0 : i32, i32
  }
  func.func @transform_4(%arg0: i32) -> (i32, i32) {
    %c0_i32 = arith.constant 0 : i32
    %c0_i32_0 = arith.constant 0 : i32
    %c0_i32_1 = arith.constant 0 : i32
    return %c0_i32, %c0_i32_0 : i32, i32
  }
  func.func @transform_5(%arg0: i32) -> (i32, i32) {
    %c0_i32 = arith.constant 0 : i32
    %c0_i32_0 = arith.constant 0 : i32
    %c0_i32_1 = arith.constant 0 : i32
    return %c0_i32, %c0_i32_0 : i32, i32
  }
  func.func @transform_6(%arg0: i32) -> (i32, i32, i32) {
    %c0_i32 = arith.constant 0 : i32
    %c0_i32_0 = arith.constant 0 : i32
    %c0_i32_1 = arith.constant 0 : i32
    return %arg0, %c0_i32, %c0_i32_0 : i32, i32, i32
  }
}

</mosaic_0001>

<llo_original>
// kernel: tpu_custom_call.1
$region0: #{tpu_custom_call.1}
  #allocation0 [shape = 'u32[]', space=smem, size = 0x4, offset = 0x4, fixed_abs, tag = 'smem constant byte address 0x4 - core index']
  #allocation1 [shape = 'u32[144,128]{1,0:T(1,128)}', space=vmem, size = 0x12000, scoped, tag = 'internal scratch']
  %s0 = inlined_call_operand.hbm [shape: f32[6,64,128], index: 0, kind: input, shape index: {}]
  %s1 = inlined_call_operand.vmem [shape: f32[64,1], index: 1, kind: input, shape index: {}]
  %s2 = inlined_call_operand.vmem [shape: f32[64,1], index: 2, kind: input, shape index: {}]
  %s3 = inlined_call_operand.vmem [shape: f32[64,1], index: 3, kind: input, shape index: {}]
  %s4 = inlined_call_operand.vmem [shape: f32[128,128], index: 4, kind: input, shape index: {}]
  %s5 = inlined_call_operand.hbm [shape: f32[128,128], index: 5, kind: input, shape index: {}]
  %s6 = inlined_call_operand.hbm [shape: f32[6,8,128], index: 6, kind: output, shape index: {}]
  %s7 = sld [smem:[#allocation0]]
  $region65: #{tpu_custom_call.1} parent=0
    _
  %s9 = ssub.s32 1, %s7
  %s10 = scalar_select 0, %s9, %s7
  $region1: #{tpu_custom_call.1} parent=0
    #allocation2 [shape = 'u8[65536]{0}', space=vmem, size = 0x10000, scoped, tag = 'input window, operand 0']
    #allocation3 [shape = 's32[2]{0}', space=sflag, size = 0x8, scoped, tag = 'scoped memory for tpu_custom_call.1']
    #allocation4 [shape = 's32[2]{0}', space=sflag, size = 0x8, scoped, tag = 'scoped memory for tpu_custom_call.1']
    #allocation5 [shape = 'u8[65536]{0}', space=vmem, size = 0x10000, scoped, tag = 'input window, operand 5, single buffered']
    #allocation6 [shape = 's32[1]{0}', space=sflag, size = 0x4, scoped, tag = 'scoped memory for tpu_custom_call.1']
    #allocation7 [shape = 'u8[8192]{0}', space=vmem, size = 0x2000, scoped, tag = 'output window, operand 0']
    %11 = vsyncpa [#allocation3], 0
    %s12 = scalar_lea.sflag [#allocation3], 1
    %13 = vsyncpa %s12, 0
    %14 = vsyncpa [#allocation6], 0
    %15 = vsyncpa [#allocation4], 0
    %s16 = scalar_lea.sflag [#allocation4], 1
    %17 = vsyncpa %s16, 0
    loop: start=0, step=1, limit=8
    $region2: #{tpu_custom_call.1} parent=1 // loop_pre_header
      _
    $region3: #{tpu_custom_call.1} parent=1 // loop_header
      %s19 = sphi 0, %s23
      %p20 = scmp.ge.s32.totalorder %s19, 8
      %s29 = sphi 0, %s31
      %s32 = sphi 0, %s29
      %s33 = sphi 0, %s32
      %s49 = sphi 0, %s33
      %s53 = sphi 0, %s53
      %s55 = sphi 0, %s53
      %s56 = sphi 0, %s55
      %s70 = sphi 0, %s56
      %s74 = sphi 0, %s74
      %s76 = sphi 0, %s74
      %s77 = sphi 0, %s76
      %s91 = sphi 0, %s77
      %s95 = sphi 0, %s95
      %s97 = sphi 0, %s95
      %s98 = sphi 0, %s97
      %s112 = sphi 0, %s98
      %s116 = sphi 0, %s116
      %s118 = sphi 0, %s116
      %s119 = sphi 0, %s118
      %s133 = sphi 0, %s119
      %s137 = sphi 0, %s137
      %s139 = sphi 0, %s137
      %s140 = sphi 0, %s139
      %s154 = sphi 0, %s140
      %s160 = sphi 0, %s162
      %s163 = sphi 0, %s160
      %s164 = sphi 0, %s163
      %s180 = sphi 0, %s164
    $region4: #{tpu_custom_call.1} parent=1 // loop_header_branch
      %22 = sbr.rel (%p20) target = $region8
    $region5: #{tpu_custom_call.1} parent=1 // loop_body
      %s24 = ssub.s32 %s19, 1
      %s25 = ssub.s32 %s19, 2
      %s26 = sadd.s32 %s19, 1
      %s27 = ssub.s32 %s19, %s26
      %p28 = scmp.eq.s32.totalorder %s27, 0
      %s30 = sadd.s32 %s29, 1
      %s31 = scalar_select %p28, %s29, %s30
      %p34 = pneg %p28
      %p35 = scmp.eq.s32.totalorder %s19, 5
      %p36 = por %p34, %p35
      %p37 = scmp.ne.s32.totalorder %s29, %s32
      %p38 = scmp.eq.s32.totalorder %s19, 0
      %p39 = por %p37, %p38
      %p40 = scmp.ne.s32.totalorder %s29, %s32
      %p41 = scmp.eq.s32.totalorder %s24, 5
      %p42 = por %p40, %p41
      %p43 = scmp.ne.s32.totalorder %s32, %s33
      %p44 = scmp.eq.s32.totalorder %s24, 0
      %p45 = por %p43, %p44
      %p46 = scmp.ne.s32.totalorder %s32, %s33
      %p47 = scmp.eq.s32.totalorder %s25, 5
      %p48 = por %p46, %p47
      %p50 = scmp.ne.s32.totalorder %s33, %s49
      %p51 = scmp.eq.s32.totalorder %s25, 0
      %p52 = por %p50, %p51
      %s54 = sadd.s32 %s53, 1
      %p57 = scmp.eq.s32.totalorder %s19, 5
      %p58 = scmp.ne.s32.totalorder %s53, %s55
      %p59 = scmp.eq.s32.totalorder %s19, 0
      %p60 = por %p58, %p59
      %p61 = scmp.ne.s32.totalorder %s53, %s55
      %p62 = scmp.eq.s32.totalorder %s24, 5
      %p63 = por %p61, %p62
      %p64 = scmp.ne.s32.totalorder %s55, %s56
      %p65 = scmp.eq.s32.totalorder %s24, 0
      %p66 = por %p64, %p65
      %p67 = scmp.ne.s32.totalorder %s55, %s56
      %p68 = scmp.eq.s32.totalorder %s25, 5
      %p69 = por %p67, %p68
      %p71 = scmp.ne.s32.totalorder %s56, %s70
      %p72 = scmp.eq.s32.totalorder %s25, 0
      %p73 = por %p71, %p72
      %s75 = sadd.s32 %s74, 1
      %p78 = scmp.eq.s32.totalorder %s19, 5
      %p79 = scmp.ne.s32.totalorder %s74, %s76
      %p80 = scmp.eq.s32.totalorder %s19, 0
      %p81 = por %p79, %p80
      %p82 = scmp.ne.s32.totalorder %s74, %s76
      %p83 = scmp.eq.s32.totalorder %s24, 5
      %p84 = por %p82, %p83
      %p85 = scmp.ne.s32.totalorder %s76, %s77
      %p86 = scmp.eq.s32.totalorder %s24, 0
      %p87 = por %p85, %p86
      %p88 = scmp.ne.s32.totalorder %s76, %s77
      %p89 = scmp.eq.s32.totalorder %s25, 5
      %p90 = por %p88, %p89
      %p92 = scmp.ne.s32.totalorder %s77, %s91
      %p93 = scmp.eq.s32.totalorder %s25, 0
      %p94 = por %p92, %p93
      %s96 = sadd.s32 %s95, 1
      %p99 = scmp.eq.s32.totalorder %s19, 5
      %p100 = scmp.ne.s32.totalorder %s95, %s97
      %p101 = scmp.eq.s32.totalorder %s19, 0
      %p102 = por %p100, %p101
      %p103 = scmp.ne.s32.totalorder %s95, %s97
      %p104 = scmp.eq.s32.totalorder %s24, 5
      %p105 = por %p103, %p104
      %p106 = scmp.ne.s32.totalorder %s97, %s98
      %p107 = scmp.eq.s32.totalorder %s24, 0
      %p108 = por %p106, %p107
      %p109 = scmp.ne.s32.totalorder %s97, %s98
      %p110 = scmp.eq.s32.totalorder %s25, 5
      %p111 = por %p109, %p110
      %p113 = scmp.ne.s32.totalorder %s98, %s112
      %p114 = scmp.eq.s32.totalorder %s25, 0
      %p115 = por %p113, %p114
      %s117 = sadd.s32 %s116, 1
      %p120 = scmp.eq.s32.totalorder %s19, 5
      %p121 = scmp.ne.s32.totalorder %s116, %s118
      %p122 = scmp.eq.s32.totalorder %s19, 0
      %p123 = por %p121, %p122
      %p124 = scmp.ne.s32.totalorder %s116, %s118
      %p125 = scmp.eq.s32.totalorder %s24, 5
      %p126 = por %p124, %p125
      %p127 = scmp.ne.s32.totalorder %s118, %s119
      %p128 = scmp.eq.s32.totalorder %s24, 0
      %p129 = por %p127, %p128
      %p130 = scmp.ne.s32.totalorder %s118, %s119
      %p131 = scmp.eq.s32.totalorder %s25, 5
      %p132 = por %p130, %p131
      %p134 = scmp.ne.s32.totalorder %s119, %s133
      %p135 = scmp.eq.s32.totalorder %s25, 0
      %p136 = por %p134, %p135
      %s138 = sadd.s32 %s137, 1
      %p141 = scmp.eq.s32.totalorder %s19, 5
      %p142 = scmp.ne.s32.totalorder %s137, %s139
      %p143 = scmp.eq.s32.totalorder %s19, 0
      %p144 = por %p142, %p143
      %p145 = scmp.ne.s32.totalorder %s137, %s139
      %p146 = scmp.eq.s32.totalorder %s24, 5
      %p147 = por %p145, %p146
      %p148 = scmp.ne.s32.totalorder %s139, %s140
      %p149 = scmp.eq.s32.totalorder %s24, 0
      %p150 = por %p148, %p149
      %p151 = scmp.ne.s32.totalorder %s139, %s140
      %p152 = scmp.eq.s32.totalorder %s25, 5
      %p153 = por %p151, %p152
      %p155 = scmp.ne.s32.totalorder %s140, %s154
      %p156 = scmp.eq.s32.totalorder %s25, 0
      %p157 = por %p155, %p156
      %s158 = ssub.s32 %s19, %s26
      %p159 = scmp.eq.s32.totalorder %s158, 0
      %s161 = sadd.s32 %s160, 1
      %s162 = scalar_select %p159, %s160, %s161
      %p165 = pneg %p159
      %p166 = scmp.eq.s32.totalorder %s19, 5
      %p167 = por %p165, %p166
      %p168 = scmp.ne.s32.totalorder %s160, %s163
      %p169 = scmp.eq.s32.totalorder %s19, 0
      %p170 = por %p168, %p169
      %p171 = scmp.ne.s32.totalorder %s160, %s163
      %p172 = scmp.eq.s32.totalorder %s24, 5
      %p173 = por %p171, %p172
      %p174 = scmp.ne.s32.totalorder %s163, %s164
      %p175 = scmp.eq.s32.totalorder %s24, 0
      %p176 = por %p174, %p175
      %p177 = scmp.ne.s32.totalorder %s163, %s164
      %p178 = scmp.eq.s32.totalorder %s25, 5
      %p179 = por %p177, %p178
      %p181 = scmp.ne.s32.totalorder %s164, %s180
      %p182 = scmp.eq.s32.totalorder %s25, 0
      %p183 = por %p181, %p182
      %p184 = scmp.le.s32.totalorder 1, %s19
      %p185 = scmp.lt.s32.totalorder %s19, 7
      %p186 = pnand %p184, %p185
      %p187 = pneg %p186
      // Predicated region
      $region9: #{tpu_custom_call.1} parent=5 // pred_check
        _
      $region10: #{tpu_custom_call.1} parent=5 // pred_check_branch
        %189 = sbr.rel (%p186) target = $region12
      $region11: #{tpu_custom_call.1} parent=5 // pred_region
        %s190 = ssub.s32 %s19, 1
        // Predicated region
        $region13: #{tpu_custom_call.1} parent=11 // pred_check
          %p191 = pneg %p66
        $region14: #{tpu_custom_call.1} parent=11 // pred_check_branch
          %193 = sbr.rel (%p191) target = $region16
        $region15: #{tpu_custom_call.1} parent=11 // pred_region
          _
        $region16: #{tpu_custom_call.1} parent=11 // pred_fallthru
          _
        // Predicated region
        $region17: #{tpu_custom_call.1} parent=11 // pred_check
          %p194 = pneg %p87
        $region18: #{tpu_custom_call.1} parent=11 // pred_check_branch
          %196 = sbr.rel (%p194) target = $region20
        $region19: #{tpu_custom_call.1} parent=11 // pred_region
          _
        $region20: #{tpu_custom_call.1} parent=11 // pred_fallthru
          _
        // Predicated region
        $region21: #{tpu_custom_call.1} parent=11 // pred_check
          %p197 = pneg %p108
        $region22: #{tpu_custom_call.1} parent=11 // pred_check_branch
          %199 = sbr.rel (%p197) target = $region24
        $region23: #{tpu_custom_call.1} parent=11 // pred_region
          _
        $region24: #{tpu_custom_call.1} parent=11 // pred_fallthru
          _
        // Predicated region
        $region25: #{tpu_custom_call.1} parent=11 // pred_check
          %p200 = pneg %p129
        $region26: #{tpu_custom_call.1} parent=11 // pred_check_branch
          %202 = sbr.rel (%p200) target = $region28
        $region27: #{tpu_custom_call.1} parent=11 // pred_region
          _
        $region28: #{tpu_custom_call.1} parent=11 // pred_fallthru
          _
        // Predicated region
        $region29: #{tpu_custom_call.1} parent=11 // pred_check
          %p203 = pneg %p150
        $region30: #{tpu_custom_call.1} parent=11 // pred_check_branch
          %205 = sbr.rel (%p203) target = $region32
        $region31: #{tpu_custom_call.1} parent=11 // pred_region
          %s207 = ssub.s32 2048, 2048
          %208 = vsyncadd [#allocation6], %s207
          %s209 = sshll.u32 [#allocation5], 4
          %s210 = int_to_ptr.vmem [resolvable:$true] %s209
          %215 = dma.hbm_to_vmem [thread:$0]  %s5, 2048, %s210, [#allocation6], 128, 128, 8
        $region32: #{tpu_custom_call.1} parent=11 // pred_fallthru
          _
      $region12: #{tpu_custom_call.1} parent=5 // pred_fallthru
        _
      %p216 = scmp.lt.s32.totalorder %s19, 6
      // Predicated region
      $region33: #{tpu_custom_call.1} parent=5 // pred_check
        %p217 = pneg %p216
      $region34: #{tpu_custom_call.1} parent=5 // pred_check_branch
        %219 = sbr.rel (%p217) target = $region36
      $region35: #{tpu_custom_call.1} parent=5 // pred_region
        // Predicated region
        $region37: #{tpu_custom_call.1} parent=35 // pred_check
          %p220 = pneg %p39
        $region38: #{tpu_custom_call.1} parent=35 // pred_check_branch
          %222 = sbr.rel (%p220) target = $region40
        $region39: #{tpu_custom_call.1} parent=35 // pred_region
          %s223 = sand.u32 %s29, 1
          %s224 = scalar_lea.sflag [#allocation3], %s223
          %s225 = sand.u32 %s29, 1
          %s226 = smul.addr %s225, 64
          %s227 = scalar_lea.vmem [#allocation2], %s226
          %s229 = ssub.s32 1024, 1024
          %230 = vsyncadd %s224, %s229
          %s231 = smul.addr %s19, 8
          %s232 = smul.addr %s231, 128
          %s233 = scalar_lea.hbm %s0, %s232
          %s234 = sshll.u32 %s227, 4
          %s235 = int_to_ptr.vmem [resolvable:$true] %s234
          %240 = dma.hbm_to_vmem [thread:$0]  %s233, 1024, %s235, %s224, 128, 128, 8
        $region40: #{tpu_custom_call.1} parent=35 // pred_fallthru
          _
      $region36: #{tpu_custom_call.1} parent=5 // pred_fallthru
        _
      %p241 = scmp.le.s32.totalorder 1, %s19
      %p242 = scmp.lt.s32.totalorder %s19, 7
      %p243 = pnand %p241, %p242
      %p244 = pneg %p243
      // Predicated region
      $region41: #{tpu_custom_call.1} parent=5 // pred_check
        _
      $region42: #{tpu_custom_call.1} parent=5 // pred_check_branch
        %246 = sbr.rel (%p243) target = $region44
      $region43: #{tpu_custom_call.1} parent=5 // pred_region
        %s247 = ssub.s32 %s19, 1
        %s248 = sand.u32 %s32, 1
        %s249 = scalar_lea.sflag [#allocation3], %s248
        %s250 = sand.u32 %s32, 1
        %s251 = smul.addr %s250, 64
        %s252 = scalar_lea.vmem [#allocation2], %s251
        // Predicated region
        $region45: #{tpu_custom_call.1} parent=43 // pred_check
          %p253 = pneg %p45
        $region46: #{tpu_custom_call.1} parent=43 // pred_check_branch
          %255 = sbr.rel (%p253) target = $region48
        $region47: #{tpu_custom_call.1} parent=43 // pred_region
          %256 = dma.done %s249, 1024
        $region48: #{tpu_custom_call.1} parent=43 // pred_fallthru
          _
        // Predicated region
        $region49: #{tpu_custom_call.1} parent=43 // pred_check
          %p257 = pneg %p150
        $region50: #{tpu_custom_call.1} parent=43 // pred_check_branch
          %259 = sbr.rel (%p257) target = $region52
        $region51: #{tpu_custom_call.1} parent=43 // pred_region
          %260 = dma.done [#allocation6], 2048
        $region52: #{tpu_custom_call.1} parent=43 // pred_fallthru
          _
        %s261 = sand.u32 %s32, 1
        %s262 = scalar_lea.sflag [#allocation3], %s261
        %s263 = sand.u32 %s32, 1
        %s264 = smul.addr %s263, 64
        %s265 = scalar_lea.vmem [#allocation2], %s264
        %p266 = pneg %p45
        %p267 = pneg %p42
        %p268 = pneg %p66
        %p269 = pneg %p63
        %p270 = pneg %p87
        %p271 = pneg %p84
        %p272 = pneg %p108
        %p273 = pneg %p105
        %p274 = pneg %p129
        %p275 = pneg %p126
        %p276 = pneg %p150
        %p277 = pneg %p147
        %p278 = pneg %p176
        %p279 = pneg %p173
        %s280 = sand.u32 %s163, 1
        %s281 = scalar_lea.sflag [#allocation4], %s280
        %s282 = sand.u32 %s163, 1
        %s283 = smul.addr %s282, 8
        %s284 = scalar_lea.vmem [#allocation7], %s283
        %v285 = vld [vmem:[%s252] sm:$0xff]
        %v286 = vld [vmem:[%s252 + $0x8] sm:$0xff]
        %v287 = vld [vmem:[%s252 + $0x10] sm:$0xff]
        %v288 = vld [vmem:[%s252 + $0x18] sm:$0xff]
        %v289 = vld [vmem:[%s252 + $0x20] sm:$0xff]
        %v290 = vld [vmem:[%s252 + $0x28] sm:$0xff]
        %v291 = vld [vmem:[%s252 + $0x30] sm:$0xff]
        %v292 = vld [vmem:[%s252 + $0x38] sm:$0xff]
        %v293 = vld [vmem:[%s1] sm:$0xff]
        %v294 = vld [vmem:[%s1 + $0x8] sm:$0xff]
        %v295 = vld [vmem:[%s1 + $0x10] sm:$0xff]
        %v296 = vld [vmem:[%s1 + $0x18] sm:$0xff]
        %v297 = vld [vmem:[%s1 + $0x20] sm:$0xff]
        %v298 = vld [vmem:[%s1 + $0x28] sm:$0xff]
        %v299 = vld [vmem:[%s1 + $0x30] sm:$0xff]
        %v300 = vld [vmem:[%s1 + $0x38] sm:$0xff]
        %v301 = vld [vmem:[%s2] sm:$0xff]
        %v302 = vld [vmem:[%s2 + $0x8] sm:$0xff]
        %v303 = vld [vmem:[%s2 + $0x10] sm:$0xff]
        %v304 = vld [vmem:[%s2 + $0x18] sm:$0xff]
        %v305 = vld [vmem:[%s2 + $0x20] sm:$0xff]
        %v306 = vld [vmem:[%s2 + $0x28] sm:$0xff]
        %v307 = vld [vmem:[%s2 + $0x30] sm:$0xff]
        %v308 = vld [vmem:[%s2 + $0x38] sm:$0xff]
        %v309 = vld [vmem:[%s3] sm:$0xff]
        %v310 = vld [vmem:[%s3 + $0x8] sm:$0xff]
        %v311 = vld [vmem:[%s3 + $0x10] sm:$0xff]
        %v312 = vld [vmem:[%s3 + $0x18] sm:$0xff]
        %v313 = vld [vmem:[%s3 + $0x20] sm:$0xff]
        %v314 = vld [vmem:[%s3 + $0x28] sm:$0xff]
        %v315 = vld [vmem:[%s3 + $0x30] sm:$0xff]
        %v316 = vld [vmem:[%s3 + $0x38] sm:$0xff]
        %v317 = vld [vmem:[%s4] sm:$0xff]
        %v318 = vld [vmem:[%s4 + $0x8] sm:$0xff]
        %v319 = vld [vmem:[%s4 + $0x10] sm:$0xff]
        %v320 = vld [vmem:[%s4 + $0x18] sm:$0xff]
        %v321 = vld [vmem:[%s4 + $0x20] sm:$0xff]
        %v322 = vld [vmem:[%s4 + $0x28] sm:$0xff]
        %v323 = vld [vmem:[%s4 + $0x30] sm:$0xff]
        %v324 = vld [vmem:[%s4 + $0x38] sm:$0xff]
        %v325 = vld [vmem:[%s4 + $0x40] sm:$0xff]
        %v326 = vld [vmem:[%s4 + $0x48] sm:$0xff]
        %v327 = vld [vmem:[%s4 + $0x50] sm:$0xff]
        %v328 = vld [vmem:[%s4 + $0x58] sm:$0xff]
        %v329 = vld [vmem:[%s4 + $0x60] sm:$0xff]
        %v330 = vld [vmem:[%s4 + $0x68] sm:$0xff]
        %v331 = vld [vmem:[%s4 + $0x70] sm:$0xff]
        %v332 = vld [vmem:[%s4 + $0x78] sm:$0xff]
        %v333 = vld [vmem:[#allocation5] sm:$0xff]
        %v334 = vld [vmem:[#allocation5 + $0x8] sm:$0xff]
        %v335 = vld [vmem:[#allocation5 + $0x10] sm:$0xff]
        %v336 = vld [vmem:[#allocation5 + $0x18] sm:$0xff]
        %v337 = vld [vmem:[#allocation5 + $0x20] sm:$0xff]
        %v338 = vld [vmem:[#allocation5 + $0x28] sm:$0xff]
        %v339 = vld [vmem:[#allocation5 + $0x30] sm:$0xff]
        %v340 = vld [vmem:[#allocation5 + $0x38] sm:$0xff]
        %v341 = vld [vmem:[#allocation5 + $0x40] sm:$0xff]
        %v342 = vld [vmem:[#allocation5 + $0x48] sm:$0xff]
        %v343 = vld [vmem:[#allocation5 + $0x50] sm:$0xff]
        %v344 = vld [vmem:[#allocation5 + $0x58] sm:$0xff]
        %v345 = vld [vmem:[#allocation5 + $0x60] sm:$0xff]
        %v346 = vld [vmem:[#allocation5 + $0x68] sm:$0xff]
        %v347 = vld [vmem:[#allocation5 + $0x70] sm:$0xff]
        %v348 = vld [vmem:[#allocation5 + $0x78] sm:$0xff]
        %v349 = vsub.f32 %v286, %v285
        %v350 = vsub.f32 %v292, %v291
        %v351 = vsub.f32 %v287, %v285
        %v352 = vsub.f32 %v288, %v286
        %v353 = vsub.f32 %v289, %v287
        %v354 = vsub.f32 %v290, %v288
        %v355 = vsub.f32 %v291, %v289
        %v356 = vsub.f32 %v292, %v290
        %v357 = vmul.f32 %v351, 0.5
        %v358 = vmul.f32 %v352, 0.5
        %v359 = vmul.f32 %v353, 0.5
        %v360 = vmul.f32 %v354, 0.5
        %v361 = vmul.f32 %v355, 0.5
        %v362 = vmul.f32 %v356, 0.5
        %v363 = vsub.f32 %v357, %v349
        %v364 = vsub.f32 %v350, %v362
        %v365 = vsub.f32 %v358, %v349
        %v366 = vsub.f32 %v359, %v357
        %v367 = vsub.f32 %v360, %v358
        %v368 = vsub.f32 %v361, %v359
        %v369 = vsub.f32 %v362, %v360
        %v370 = vsub.f32 %v350, %v361
        %v371 = vmul.f32 %v365, 0.5
        %v372 = vmul.f32 %v366, 0.5
        %v373 = vmul.f32 %v367, 0.5
        %v374 = vmul.f32 %v368, 0.5
        %v375 = vmul.f32 %v369, 0.5
        %v376 = vmul.f32 %v370, 0.5
        %v377 = vmul.f32 %v363, %v363
        %v378 = vmul.f32 %v371, %v371
        %v379 = vmul.f32 %v372, %v372
        %v380 = vmul.f32 %v373, %v373
        %v381 = vmul.f32 %v374, %v374
        %v382 = vmul.f32 %v375, %v375
        %v383 = vmul.f32 %v376, %v376
        %v384 = vmul.f32 %v364, %v364
        %v385 = vrot.slane %v349, 1
        %v386 = vrot.slane %v357, 1
        %v387 = vrot.slane %v358, 1
        %v388 = vrot.slane %v359, 1
        %v389 = vrot.slane %v360, 1
        %v390 = vrot.slane %v361, 1
        %v391 = vrot.slane %v362, 1
        %v392 = vrot.slane %v350, 1
        %v393 = vlaneseq
        %v394 = vshrl.u32 %v393, 7
        %vm395 = vcmp.lt.s32.totalorder %v394, 7
        %v396 = vsel %vm395, %v391, %v392
        %v397 = vsel %vm395, %v390, %v391
        %v398 = vsel %vm395, %v389, %v390
        %v399 = vsel %vm395, %v388, %v389
        %v400 = vsel %vm395, %v387, %v388
        %v401 = vsel %vm395, %v386, %v387
        %v402 = vsel %vm395, %v385, %v386
        %v403 = vsel %vm395, %v392, %v385
        %v404 = vrot.slane %v349, 7
        %v405 = vrot.slane %v357, 7
        %v406 = vrot.slane %v358, 7
        %v407 = vrot.slane %v359, 7
        %v408 = vrot.slane %v360, 7
        %v409 = vrot.slane %v361, 7
        %v410 = vrot.slane %v362, 7
        %v411 = vrot.slane %v350, 7
        %vm412 = vcmp.lt.s32.totalorder %v394, 1
        %v413 = vsel %vm412, %v410, %v411
        %v414 = vsel %vm412, %v409, %v410
        %v415 = vsel %vm412, %v408, %v409
        %v416 = vsel %vm412, %v407, %v408
        %v417 = vsel %vm412, %v406, %v407
        %v418 = vsel %vm412, %v405, %v406
        %v419 = vsel %vm412, %v404, %v405
        %v420 = vsel %vm412, %v411, %v404
        %422 = vset.pattern.permute.xlu0 0
        %423 = vperm.xlu0 %422, %v293
        %v424 = vpop.permute.xlu0 %423
        %427 = vset.pattern.permute.xlu0 0
        %428 = vperm.xlu0 %427, %v294
        %v429 = vpop.permute.xlu0 %428
        %432 = vset.pattern.permute.xlu0 0
        %433 = vperm.xlu0 %432, %v295
        %v434 = vpop.permute.xlu0 %433
        %437 = vset.pattern.permute.xlu0 0
        %438 = vperm.xlu0 %437, %v296
        %v439 = vpop.permute.xlu0 %438
        %442 = vset.pattern.permute.xlu0 0
        %443 = vperm.xlu0 %442, %v297
        %v444 = vpop.permute.xlu0 %443
        %447 = vset.pattern.permute.xlu0 0
        %448 = vperm.xlu0 %447, %v298
        %v449 = vpop.permute.xlu0 %448
        %452 = vset.pattern.permute.xlu0 0
        %453 = vperm.xlu0 %452, %v299
        %v454 = vpop.permute.xlu0 %453
        %457 = vset.pattern.permute.xlu0 0
        %458 = vperm.xlu0 %457, %v300
        %v459 = vpop.permute.xlu0 %458
        %v461 = vmul.f32 %v424, %v402
        %v462 = vmul.f32 %v429, %v401
        %v463 = vmul.f32 %v434, %v400
        %v464 = vmul.f32 %v439, %v399
        %v465 = vmul.f32 %v444, %v398
        %v466 = vmul.f32 %v449, %v397
        %v467 = vmul.f32 %v454, %v396
        %v468 = vmul.f32 %v459, %v403
        %470 = vset.pattern.permute.xlu0 0
        %471 = vperm.xlu0 %470, %v301
        %v472 = vpop.permute.xlu0 %471
        %475 = vset.pattern.permute.xlu0 0
        %476 = vperm.xlu0 %475, %v302
        %v477 = vpop.permute.xlu0 %476
        %480 = vset.pattern.permute.xlu0 0
        %481 = vperm.xlu0 %480, %v303
        %v482 = vpop.permute.xlu0 %481
        %485 = vset.pattern.permute.xlu0 0
        %486 = vperm.xlu0 %485, %v304
        %v487 = vpop.permute.xlu0 %486
        %490 = vset.pattern.permute.xlu0 0
        %491 = vperm.xlu0 %490, %v305
        %v492 = vpop.permute.xlu0 %491
        %495 = vset.pattern.permute.xlu0 0
        %496 = vperm.xlu0 %495, %v306
        %v497 = vpop.permute.xlu0 %496
        %500 = vset.pattern.permute.xlu0 0
        %501 = vperm.xlu0 %500, %v307
        %v502 = vpop.permute.xlu0 %501
        %505 = vset.pattern.permute.xlu0 0
        %506 = vperm.xlu0 %505, %v308
        %v507 = vpop.permute.xlu0 %506
        %v509 = vmul.f32 %v472, %v349
        %v510 = vmul.f32 %v477, %v357
        %v511 = vmul.f32 %v482, %v358
        %v512 = vmul.f32 %v487, %v359
        %v513 = vmul.f32 %v492, %v360
        %v514 = vmul.f32 %v497, %v361
        %v515 = vmul.f32 %v502, %v362
        %v516 = vmul.f32 %v507, %v350
        %v517 = vadd.f32 %v461, %v509
        %v518 = vadd.f32 %v462, %v510
        %v519 = vadd.f32 %v463, %v511
        %v520 = vadd.f32 %v464, %v512
        %v521 = vadd.f32 %v465, %v513
        %v522 = vadd.f32 %v466, %v514
        %v523 = vadd.f32 %v467, %v515
        %v524 = vadd.f32 %v468, %v516
        %526 = vset.pattern.permute.xlu0 0
        %527 = vperm.xlu0 %526, %v309
        %v528 = vpop.permute.xlu0 %527
        %531 = vset.pattern.permute.xlu0 0
        %532 = vperm.xlu0 %531, %v310
        %v533 = vpop.permute.xlu0 %532
        %536 = vset.pattern.permute.xlu0 0
        %537 = vperm.xlu0 %536, %v311
        %v538 = vpop.permute.xlu0 %537
        %541 = vset.pattern.permute.xlu0 0
        %542 = vperm.xlu0 %541, %v312
        %v543 = vpop.permute.xlu0 %542
        %546 = vset.pattern.permute.xlu0 0
        %547 = vperm.xlu0 %546, %v313
        %v548 = vpop.permute.xlu0 %547
        %551 = vset.pattern.permute.xlu0 0
        %552 = vperm.xlu0 %551, %v314
        %v553 = vpop.permute.xlu0 %552
        %556 = vset.pattern.permute.xlu0 0
        %557 = vperm.xlu0 %556, %v315
        %v558 = vpop.permute.xlu0 %557
        %561 = vset.pattern.permute.xlu0 0
        %562 = vperm.xlu0 %561, %v316
        %v563 = vpop.permute.xlu0 %562
        %v565 = vmul.f32 %v528, %v420
        %v566 = vmul.f32 %v533, %v419
        %v567 = vmul.f32 %v538, %v418
        %v568 = vmul.f32 %v543, %v417
        %v569 = vmul.f32 %v548, %v416
        %v570 = vmul.f32 %v553, %v415
        %v571 = vmul.f32 %v558, %v414
        %v572 = vmul.f32 %v563, %v413
        %v573 = vadd.f32 %v517, %v565
        %v574 = vadd.f32 %v518, %v566
        %v575 = vadd.f32 %v519, %v567
        %v576 = vadd.f32 %v520, %v568
        %v577 = vadd.f32 %v521, %v569
        %v578 = vadd.f32 %v522, %v570
        %v579 = vadd.f32 %v523, %v571
        %v580 = vadd.f32 %v524, %v572
        %v581 = vmul.f32 %v573, %v573
        %v582 = vmul.f32 %v574, %v574
        %v583 = vmul.f32 %v575, %v575
        %v584 = vmul.f32 %v576, %v576
        %v585 = vmul.f32 %v577, %v577
        %v586 = vmul.f32 %v578, %v578
        %v587 = vmul.f32 %v579, %v579
        %v588 = vmul.f32 %v580, %v580
        %589 = vmatprep.subr.mxu0 0.0
        %590 = vmatpush1.msra.mxu0 %v332
        %591 = vmatprep.subr.mxu0 0.0
        %592 = vmatpush1.msra.mxu0 %v331
        %593 = vmatprep.subr.mxu0 0.0
        %594 = vmatpush1.msra.mxu0 %v330
        %595 = vmatprep.subr.mxu0 0.0
        %596 = vmatpush1.msra.mxu0 %v329
        %597 = vmatprep.subr.mxu0 0.0
        %598 = vmatpush1.msra.mxu0 %v328
        %599 = vmatprep.subr.mxu0 0.0
        %600 = vmatpush1.msra.mxu0 %v327
        %601 = vmatprep.subr.mxu0 0.0
        %602 = vmatpush1.msra.mxu0 %v326
        %603 = vmatprep.subr.mxu0 0.0
        %604 = vmatpush1.msra.mxu0 %v325
        %605 = vmatprep.subr.mxu0 0.0
        %606 = vmatpush1.msra.mxu0 %v324
        %607 = vmatprep.subr.mxu0 0.0
        %608 = vmatpush1.msra.mxu0 %v323
        %609 = vmatprep.subr.mxu0 0.0
        %610 = vmatpush1.msra.mxu0 %v322
        %611 = vmatprep.subr.mxu0 0.0
        %612 = vmatpush1.msra.mxu0 %v321
        %613 = vmatprep.subr.mxu0 0.0
        %614 = vmatpush1.msra.mxu0 %v320
        %615 = vmatprep.subr.mxu0 0.0
        %616 = vmatpush1.msra.mxu0 %v319
        %617 = vmatprep.subr.mxu0 0.0
        %618 = vmatpush1.msra.mxu0 %v318
        %619 = vmatprep.subr.mxu0 0.0
        %620 = vmatpush1.msra.mxu0 %v317
        %621 = vmatprep.subr.mxu0 0.0
        %622 = vmatpush2.msra.mxu0 0.0
        %623 = vmatprep.subr.mxu0 0.0
        %624 = vmatpush2.msra.mxu0 0.0
        %625 = vmatprep.subr.mxu0 0.0
        %626 = vmatpush2.msra.mxu0 0.0
        %627 = vmatprep.subr.mxu0 0.0
        %628 = vmatpush2.msra.mxu0 0.0
        %629 = vmatprep.subr.mxu0 0.0
        %630 = vmatpush2.msra.mxu0 0.0
        %631 = vmatprep.subr.mxu0 0.0
        %632 = vmatpush2.msra.mxu0 0.0
        %633 = vmatprep.subr.mxu0 0.0
        %634 = vmatpush2.msra.mxu0 0.0
        %635 = vmatprep.subr.mxu0 0.0
        %636 = vmatpush2.msra.mxu0 0.0
        %637 = vmatprep.subr.mxu0 0.0
        %638 = vmatpush2.msra.mxu0 0.0
        %639 = vmatprep.subr.mxu0 0.0
        %640 = vmatpush2.msra.mxu0 0.0
        %641 = vmatprep.subr.mxu0 0.0
        %642 = vmatpush2.msra.mxu0 0.0
        %643 = vmatprep.subr.mxu0 0.0
        %644 = vmatpush2.msra.mxu0 0.0
        %645 = vmatprep.subr.mxu0 0.0
        %646 = vmatpush2.msra.mxu0 0.0
        %647 = vmatprep.subr.mxu0 0.0
        %648 = vmatpush2.msra.mxu0 0.0
        %649 = vmatprep.subr.mxu0 0.0
        %650 = vmatpush2.msra.mxu0 0.0
        %651 = vmatprep.subr.mxu0 0.0
        %652 = vmatpush2.msra.mxu0 0.0
        %653 = vmatprep.mubr.f32.mxu0 0.0
        %654 = vmatmul.mubr.f32.gmra.mxu0 %v349
        %v655 = vpop.f32.mrf.mxu0
        %v656 = vadd.f32 0.0, %v655
        %v657 = vpop.f32.mrf.mxu0
        %658 = vmatprep.mubr.f32.mxu0 0.0
        %659 = vmatmul.mubr.f32.gmra.mxu0 %v357
        %v660 = vpop.f32.mrf.mxu0
        %v661 = vadd.f32 0.0, %v660
        %v662 = vpop.f32.mrf.mxu0
        %663 = vmatprep.mubr.f32.mxu0 0.0
        %664 = vmatmul.mubr.f32.gmra.mxu0 %v358
        %v665 = vpop.f32.mrf.mxu0
        %v666 = vadd.f32 0.0, %v665
        %v667 = vpop.f32.mrf.mxu0
        %668 = vmatprep.mubr.f32.mxu0 0.0
        %669 = vmatmul.mubr.f32.gmra.mxu0 %v359
        %v670 = vpop.f32.mrf.mxu0
        %v671 = vadd.f32 0.0, %v670
        %v672 = vpop.f32.mrf.mxu0
        %673 = vmatprep.mubr.f32.mxu0 0.0
        %674 = vmatmul.mubr.f32.gmra.mxu0 %v360
        %v675 = vpop.f32.mrf.mxu0
        %v676 = vadd.f32 0.0, %v675
        %v677 = vpop.f32.mrf.mxu0
        %678 = vmatprep.mubr.f32.mxu0 0.0
        %679 = vmatmul.mubr.f32.gmra.mxu0 %v361
        %v680 = vpop.f32.mrf.mxu0
        %v681 = vadd.f32 0.0, %v680
        %v682 = vpop.f32.mrf.mxu0
        %683 = vmatprep.mubr.f32.mxu0 0.0
        %684 = vmatmul.mubr.f32.gmra.mxu0 %v362
        %v685 = vpop.f32.mrf.mxu0
        %v686 = vadd.f32 0.0, %v685
        %v687 = vpop.f32.mrf.mxu0
        %688 = vmatprep.mubr.f32.mxu0 0.0
        %689 = vmatmul.mubr.f32.gmra.mxu0 %v350
        %v690 = vpop.f32.mrf.mxu0
        %v691 = vadd.f32 0.0, %v690
        %v692 = vpop.f32.mrf.mxu0
        %693 = vdwg.mxu0
        %v694 = vmul.f32 %v656, %v656
        %v695 = vmul.f32 %v661, %v661
        %v696 = vmul.f32 %v666, %v666
        %v697 = vmul.f32 %v671, %v671
        %v698 = vmul.f32 %v676, %v676
        %v699 = vmul.f32 %v681, %v681
        %v700 = vmul.f32 %v686, %v686
        %v701 = vmul.f32 %v691, %v691
        %v702 = vadd.f32 %v581, %v694
        %v703 = vadd.f32 %v582, %v695
        %v704 = vadd.f32 %v583, %v696
        %v705 = vadd.f32 %v584, %v697
        %v706 = vadd.f32 %v585, %v698
        %v707 = vadd.f32 %v586, %v699
        %v708 = vadd.f32 %v587, %v700
        %v709 = vadd.f32 %v588, %v701
        %v710 = vrot.slane %v285, 1
        %v711 = vrot.slane %v286, 1
        %v712 = vrot.slane %v287, 1
        %v713 = vrot.slane %v288, 1
        %v714 = vrot.slane %v289, 1
        %v715 = vrot.slane %v290, 1
        %v716 = vrot.slane %v291, 1
        %v717 = vrot.slane %v292, 1
        %v718 = vsel %vm395, %v716, %v717
        %v719 = vsel %vm395, %v715, %v716
        %v720 = vsel %vm395, %v714, %v715
        %v721 = vsel %vm395, %v713, %v714
        %v722 = vsel %vm395, %v712, %v713
        %v723 = vsel %vm395, %v711, %v712
        %v724 = vsel %vm395, %v710, %v711
        %v725 = vsel %vm395, %v717, %v710
        %v726 = vrot.slane %v285, 7
        %v727 = vrot.slane %v286, 7
        %v728 = vrot.slane %v287, 7
        %v729 = vrot.slane %v288, 7
        %v730 = vrot.slane %v289, 7
        %v731 = vrot.slane %v290, 7
        %v732 = vrot.slane %v291, 7
        %v733 = vrot.slane %v292, 7
        %v734 = vsel %vm412, %v732, %v733
        %v735 = vsel %vm412, %v731, %v732
        %v736 = vsel %vm412, %v730, %v731
        %v737 = vsel %vm412, %v729, %v730
        %v738 = vsel %vm412, %v728, %v729
        %v739 = vsel %vm412, %v727, %v728
        %v740 = vsel %vm412, %v726, %v727
        %v741 = vsel %vm412, %v733, %v726
        %v742 = vmul.f32 %v424, %v724
        %v743 = vmul.f32 %v429, %v723
        %v744 = vmul.f32 %v434, %v722
        %v745 = vmul.f32 %v439, %v721
        %v746 = vmul.f32 %v444, %v720
        %v747 = vmul.f32 %v449, %v719
        %v748 = vmul.f32 %v454, %v718
        %v749 = vmul.f32 %v459, %v725
        %v750 = vmul.f32 %v472, %v285
        %v751 = vmul.f32 %v477, %v286
        %v752 = vmul.f32 %v482, %v287
        %v753 = vmul.f32 %v487, %v288
        %v754 = vmul.f32 %v492, %v289
        %v755 = vmul.f32 %v497, %v290
        %v756 = vmul.f32 %v502, %v291
        %v757 = vmul.f32 %v507, %v292
        %v758 = vadd.f32 %v742, %v750
        %v759 = vadd.f32 %v743, %v751
        %v760 = vadd.f32 %v744, %v752
        %v761 = vadd.f32 %v745, %v753
        %v762 = vadd.f32 %v746, %v754
        %v763 = vadd.f32 %v747, %v755
        %v764 = vadd.f32 %v748, %v756
        %v765 = vadd.f32 %v749, %v757
        %v766 = vmul.f32 %v528, %v741
        %v767 = vmul.f32 %v533, %v740
        %v768 = vmul.f32 %v538, %v739
        %v769 = vmul.f32 %v543, %v738
        %v770 = vmul.f32 %v548, %v737
        %v771 = vmul.f32 %v553, %v736
        %v772 = vmul.f32 %v558, %v735
        %v773 = vmul.f32 %v563, %v734
        %v774 = vadd.f32 %v758, %v766
        %v775 = vadd.f32 %v759, %v767
        %v776 = vadd.f32 %v760, %v768
        %v777 = vadd.f32 %v761, %v769
        %v778 = vadd.f32 %v762, %v770
        %v779 = vadd.f32 %v763, %v771
        %v780 = vadd.f32 %v764, %v772
        %v781 = vadd.f32 %v765, %v773
        %v782 = vrot.slane %v774, 1
        %v783 = vrot.slane %v775, 1
        %v784 = vrot.slane %v776, 1
        %v785 = vrot.slane %v777, 1
        %v786 = vrot.slane %v778, 1
        %v787 = vrot.slane %v779, 1
        %v788 = vrot.slane %v780, 1
        %v789 = vrot.slane %v781, 1
        %v790 = vsel %vm395, %v788, %v789
        %v791 = vsel %vm395, %v787, %v788
        %v792 = vsel %vm395, %v786, %v787
        %v793 = vsel %vm395, %v785, %v786
        %v794 = vsel %vm395, %v784, %v785
        %v795 = vsel %vm395, %v783, %v784
        %v796 = vsel %vm395, %v782, %v783
        %v797 = vsel %vm395, %v789, %v782
        %v798 = vrot.slane %v774, 7
        %v799 = vrot.slane %v775, 7
        %v800 = vrot.slane %v776, 7
        %v801 = vrot.slane %v777, 7
        %v802 = vrot.slane %v778, 7
        %v803 = vrot.slane %v779, 7
        %v804 = vrot.slane %v780, 7
        %v805 = vrot.slane %v781, 7
        %v806 = vsel %vm412, %v804, %v805
        %v807 = vsel %vm412, %v803, %v804
        %v808 = vsel %vm412, %v802, %v803
        %v809 = vsel %vm412, %v801, %v802
        %v810 = vsel %vm412, %v800, %v801
        %v811 = vsel %vm412, %v799, %v800
        %v812 = vsel %vm412, %v798, %v799
        %v813 = vsel %vm412, %v805, %v798
        %v814 = vmul.f32 %v424, %v796
        %v815 = vmul.f32 %v429, %v795
        %v816 = vmul.f32 %v434, %v794
        %v817 = vmul.f32 %v439, %v793
        %v818 = vmul.f32 %v444, %v792
        %v819 = vmul.f32 %v449, %v791
        %v820 = vmul.f32 %v454, %v790
        %v821 = vmul.f32 %v459, %v797
        %v822 = vmul.f32 %v472, %v774
        %v823 = vmul.f32 %v477, %v775
        %v824 = vmul.f32 %v482, %v776
        %v825 = vmul.f32 %v487, %v777
        %v826 = vmul.f32 %v492, %v778
        %v827 = vmul.f32 %v497, %v779
        %v828 = vmul.f32 %v502, %v780
        %v829 = vmul.f32 %v507, %v781
        %v830 = vadd.f32 %v814, %v822
        %v831 = vadd.f32 %v815, %v823
        %v832 = vadd.f32 %v816, %v824
        %v833 = vadd.f32 %v817, %v825
        %v834 = vadd.f32 %v818, %v826
        %v835 = vadd.f32 %v819, %v827
        %v836 = vadd.f32 %v820, %v828
        %v837 = vadd.f32 %v821, %v829
        %v838 = vmul.f32 %v528, %v813
        %v839 = vmul.f32 %v533, %v812
        %v840 = vmul.f32 %v538, %v811
        %v841 = vmul.f32 %v543, %v810
        %v842 = vmul.f32 %v548, %v809
        %v843 = vmul.f32 %v553, %v808
        %v844 = vmul.f32 %v558, %v807
        %v845 = vmul.f32 %v563, %v806
        %v846 = vadd.f32 %v830, %v838
        %v847 = vadd.f32 %v831, %v839
        %v848 = vadd.f32 %v832, %v840
        %v849 = vadd.f32 %v833, %v841
        %v850 = vadd.f32 %v834, %v842
        %v851 = vadd.f32 %v835, %v843
        %v852 = vadd.f32 %v836, %v844
        %v853 = vadd.f32 %v837, %v845
        %v854 = vmul.f32 %v846, %v846
        %v855 = vmul.f32 %v847, %v847
        %v856 = vmul.f32 %v848, %v848
        %v857 = vmul.f32 %v849, %v849
        %v858 = vmul.f32 %v850, %v850
        %v859 = vmul.f32 %v851, %v851
        %v860 = vmul.f32 %v852, %v852
        %v861 = vmul.f32 %v853, %v853
        %v862 = vadd.f32 %v377, %v854
        %v863 = vadd.f32 %v378, %v855
        %v864 = vadd.f32 %v379, %v856
        %v865 = vadd.f32 %v380, %v857
        %v866 = vadd.f32 %v381, %v858
        %v867 = vadd.f32 %v382, %v859
        %v868 = vadd.f32 %v383, %v860
        %v869 = vadd.f32 %v384, %v861
        %870 = vmatprep.subr.mxu0 0.0
        %871 = vmatpush1.msra.mxu0 %v332
        %872 = vmatprep.subr.mxu0 0.0
        %873 = vmatpush1.msra.mxu0 %v331
        %874 = vmatprep.subr.mxu0 0.0
        %875 = vmatpush1.msra.mxu0 %v330
        %876 = vmatprep.subr.mxu0 0.0
        %877 = vmatpush1.msra.mxu0 %v329
        %878 = vmatprep.subr.mxu0 0.0
        %879 = vmatpush1.msra.mxu0 %v328
        %880 = vmatprep.subr.mxu0 0.0
        %881 = vmatpush1.msra.mxu0 %v327
        %882 = vmatprep.subr.mxu0 0.0
        %883 = vmatpush1.msra.mxu0 %v326
        %884 = vmatprep.subr.mxu0 0.0
        %885 = vmatpush1.msra.mxu0 %v325
        %886 = vmatprep.subr.mxu0 0.0
        %887 = vmatpush1.msra.mxu0 %v324
        %888 = vmatprep.subr.mxu0 0.0
        %889 = vmatpush1.msra.mxu0 %v323
        %890 = vmatprep.subr.mxu0 0.0
        %891 = vmatpush1.msra.mxu0 %v322
        %892 = vmatprep.subr.mxu0 0.0
        %893 = vmatpush1.msra.mxu0 %v321
        %894 = vmatprep.subr.mxu0 0.0
        %895 = vmatpush1.msra.mxu0 %v320
        %896 = vmatprep.subr.mxu0 0.0
        %897 = vmatpush1.msra.mxu0 %v319
        %898 = vmatprep.subr.mxu0 0.0
        %899 = vmatpush1.msra.mxu0 %v318
        %900 = vmatprep.subr.mxu0 0.0
        %901 = vmatpush1.msra.mxu0 %v317
        %902 = vmatprep.subr.mxu0 0.0
        %903 = vmatpush2.msra.mxu0 0.0
        %904 = vmatprep.subr.mxu0 0.0
        %905 = vmatpush2.msra.mxu0 0.0
        %906 = vmatprep.subr.mxu0 0.0
        %907 = vmatpush2.msra.mxu0 0.0
        %908 = vmatprep.subr.mxu0 0.0
        %909 = vmatpush2.msra.mxu0 0.0
        %910 = vmatprep.subr.mxu0 0.0
        %911 = vmatpush2.msra.mxu0 0.0
        %912 = vmatprep.subr.mxu0 0.0
        %913 = vmatpush2.msra.mxu0 0.0
        %914 = vmatprep.subr.mxu0 0.0
        %915 = vmatpush2.msra.mxu0 0.0
        %916 = vmatprep.subr.mxu0 0.0
        %917 = vmatpush2.msra.mxu0 0.0
        %918 = vmatprep.subr.mxu0 0.0
        %919 = vmatpush2.msra.mxu0 0.0
        %920 = vmatprep.subr.mxu0 0.0
        %921 = vmatpush2.msra.mxu0 0.0
        %922 = vmatprep.subr.mxu0 0.0
        %923 = vmatpush2.msra.mxu0 0.0
        %924 = vmatprep.subr.mxu0 0.0
        %925 = vmatpush2.msra.mxu0 0.0
        %926 = vmatprep.subr.mxu0 0.0
        %927 = vmatpush2.msra.mxu0 0.0
        %928 = vmatprep.subr.mxu0 0.0
        %929 = vmatpush2.msra.mxu0 0.0
        %930 = vmatprep.subr.mxu0 0.0
        %931 = vmatpush2.msra.mxu0 0.0
        %932 = vmatprep.subr.mxu0 0.0
        %933 = vmatpush2.msra.mxu0 0.0
        %934 = vmatprep.mubr.f32.mxu0 0.0
        %935 = vmatmul.mubr.f32.gmra.mxu0 %v774
        %v936 = vpop.f32.mrf.mxu0
        %v937 = vadd.f32 0.0, %v936
        %v938 = vpop.f32.mrf.mxu0
        %939 = vmatprep.mubr.f32.mxu0 0.0
        %940 = vmatmul.mubr.f32.gmra.mxu0 %v775
        %v941 = vpop.f32.mrf.mxu0
        %v942 = vadd.f32 0.0, %v941
        %v943 = vpop.f32.mrf.mxu0
        %944 = vmatprep.mubr.f32.mxu0 0.0
        %945 = vmatmul.mubr.f32.gmra.mxu0 %v776
        %v946 = vpop.f32.mrf.mxu0
        %v947 = vadd.f32 0.0, %v946
        %v948 = vpop.f32.mrf.mxu0
        %949 = vmatprep.mubr.f32.mxu0 0.0
        %950 = vmatmul.mubr.f32.gmra.mxu0 %v777
        %v951 = vpop.f32.mrf.mxu0
        %v952 = vadd.f32 0.0, %v951
        %v953 = vpop.f32.mrf.mxu0
        %954 = vmatprep.mubr.f32.mxu0 0.0
        %955 = vmatmul.mubr.f32.gmra.mxu0 %v778
        %v956 = vpop.f32.mrf.mxu0
        %v957 = vadd.f32 0.0, %v956
        %v958 = vpop.f32.mrf.mxu0
        %959 = vmatprep.mubr.f32.mxu0 0.0
        %960 = vmatmul.mubr.f32.gmra.mxu0 %v779
        %v961 = vpop.f32.mrf.mxu0
        %v962 = vadd.f32 0.0, %v961
        %v963 = vpop.f32.mrf.mxu0
        %964 = vmatprep.mubr.f32.mxu0 0.0
        %965 = vmatmul.mubr.f32.gmra.mxu0 %v780
        %v966 = vpop.f32.mrf.mxu0
        %v967 = vadd.f32 0.0, %v966
        %v968 = vpop.f32.mrf.mxu0
        %969 = vmatprep.mubr.f32.mxu0 0.0
        %970 = vmatmul.mubr.f32.gmra.mxu0 %v781
        %v971 = vpop.f32.mrf.mxu0
        %v972 = vadd.f32 0.0, %v971
        %v973 = vpop.f32.mrf.mxu0
        %974 = vdwg.mxu0
        %v975 = vmul.f32 %v937, %v937
        %v976 = vmul.f32 %v942, %v942
        %v977 = vmul.f32 %v947, %v947
        %v978 = vmul.f32 %v952, %v952
        %v979 = vmul.f32 %v957, %v957
        %v980 = vmul.f32 %v962, %v962
        %v981 = vmul.f32 %v967, %v967
        %v982 = vmul.f32 %v972, %v972
        %v983 = vadd.f32 %v702, %v975
        %v984 = vadd.f32 %v703, %v976
        %v985 = vadd.f32 %v704, %v977
        %v986 = vadd.f32 %v705, %v978
        %v987 = vadd.f32 %v706, %v979
        %v988 = vadd.f32 %v707, %v980
        %v989 = vadd.f32 %v708, %v981
        %v990 = vadd.f32 %v709, %v982
        %991 = vmatprep.subr.mxu0 0.0
        %992 = vmatpush1.msra.mxu0 %v348
        %993 = vmatprep.subr.mxu0 0.0
        %994 = vmatpush1.msra.mxu0 %v347
        %995 = vmatprep.subr.mxu0 0.0
        %996 = vmatpush1.msra.mxu0 %v346
        %997 = vmatprep.subr.mxu0 0.0
        %998 = vmatpush1.msra.mxu0 %v345
        %999 = vmatprep.subr.mxu0 0.0
        %1000 = vmatpush1.msra.mxu0 %v344
        %1001 = vmatprep.subr.mxu0 0.0
        %1002 = vmatpush1.msra.mxu0 %v343
        %1003 = vmatprep.subr.mxu0 0.0
        %1004 = vmatpush1.msra.mxu0 %v342
        %1005 = vmatprep.subr.mxu0 0.0
        %1006 = vmatpush1.msra.mxu0 %v341
        %1007 = vmatprep.subr.mxu0 0.0
        %1008 = vmatpush1.msra.mxu0 %v340
        %1009 = vmatprep.subr.mxu0 0.0
        %1010 = vmatpush1.msra.mxu0 %v339
        %1011 = vmatprep.subr.mxu0 0.0
        %1012 = vmatpush1.msra.mxu0 %v338
        %1013 = vmatprep.subr.mxu0 0.0
        %1014 = vmatpush1.msra.mxu0 %v337
        %1015 = vmatprep.subr.mxu0 0.0
        %1016 = vmatpush1.msra.mxu0 %v336
        %1017 = vmatprep.subr.mxu0 0.0
        %1018 = vmatpush1.msra.mxu0 %v335
        %1019 = vmatprep.subr.mxu0 0.0
        %1020 = vmatpush1.msra.mxu0 %v334
        %1021 = vmatprep.subr.mxu0 0.0
        %1022 = vmatpush1.msra.mxu0 %v333
        %1023 = vmatprep.subr.mxu0 0.0
        %1024 = vmatpush2.msra.mxu0 0.0
        %1025 = vmatprep.subr.mxu0 0.0
        %1026 = vmatpush2.msra.mxu0 0.0
        %1027 = vmatprep.subr.mxu0 0.0
        %1028 = vmatpush2.msra.mxu0 0.0
        %1029 = vmatprep.subr.mxu0 0.0
        %1030 = vmatpush2.msra.mxu0 0.0
        %1031 = vmatprep.subr.mxu0 0.0
        %1032 = vmatpush2.msra.mxu0 0.0
        %1033 = vmatprep.subr.mxu0 0.0
        %1034 = vmatpush2.msra.mxu0 0.0
        %1035 = vmatprep.subr.mxu0 0.0
        %1036 = vmatpush2.msra.mxu0 0.0
        %1037 = vmatprep.subr.mxu0 0.0
        %1038 = vmatpush2.msra.mxu0 0.0
        %1039 = vmatprep.subr.mxu0 0.0
        %1040 = vmatpush2.msra.mxu0 0.0
        %1041 = vmatprep.subr.mxu0 0.0
        %1042 = vmatpush2.msra.mxu0 0.0
        %1043 = vmatprep.subr.mxu0 0.0
        %1044 = vmatpush2.msra.mxu0 0.0
        %1045 = vmatprep.subr.mxu0 0.0
        %1046 = vmatpush2.msra.mxu0 0.0
        %1047 = vmatprep.subr.mxu0 0.0
        %1048 = vmatpush2.msra.mxu0 0.0
        %1049 = vmatprep.subr.mxu0 0.0
        %1050 = vmatpush2.msra.mxu0 0.0
        %1051 = vmatprep.subr.mxu0 0.0
        %1052 = vmatpush2.msra.mxu0 0.0
        %1053 = vmatprep.subr.mxu0 0.0
        %1054 = vmatpush2.msra.mxu0 0.0
        %1055 = vmatprep.mubr.f32.mxu0 0.0
        %1056 = vmatmul.mubr.f32.gmra.mxu0 %v285
        %v1057 = vpop.f32.mrf.mxu0
        %v1058 = vadd.f32 0.0, %v1057
        %v1059 = vpop.f32.mrf.mxu0
        %1060 = vmatprep.mubr.f32.mxu0 0.0
        %1061 = vmatmul.mubr.f32.gmra.mxu0 %v286
        %v1062 = vpop.f32.mrf.mxu0
        %v1063 = vadd.f32 0.0, %v1062
        %v1064 = vpop.f32.mrf.mxu0
        %1065 = vmatprep.mubr.f32.mxu0 0.0
        %1066 = vmatmul.mubr.f32.gmra.mxu0 %v287
        %v1067 = vpop.f32.mrf.mxu0
        %v1068 = vadd.f32 0.0, %v1067
        %v1069 = vpop.f32.mrf.mxu0
        %1070 = vmatprep.mubr.f32.mxu0 0.0
        %1071 = vmatmul.mubr.f32.gmra.mxu0 %v288
        %v1072 = vpop.f32.mrf.mxu0
        %v1073 = vadd.f32 0.0, %v1072
        %v1074 = vpop.f32.mrf.mxu0
        %1075 = vmatprep.mubr.f32.mxu0 0.0
        %1076 = vmatmul.mubr.f32.gmra.mxu0 %v289
        %v1077 = vpop.f32.mrf.mxu0
        %v1078 = vadd.f32 0.0, %v1077
        %v1079 = vpop.f32.mrf.mxu0
        %1080 = vmatprep.mubr.f32.mxu0 0.0
        %1081 = vmatmul.mubr.f32.gmra.mxu0 %v290
        %v1082 = vpop.f32.mrf.mxu0
        %v1083 = vadd.f32 0.0, %v1082
        %v1084 = vpop.f32.mrf.mxu0
        %1085 = vmatprep.mubr.f32.mxu0 0.0
        %1086 = vmatmul.mubr.f32.gmra.mxu0 %v291
        %v1087 = vpop.f32.mrf.mxu0
        %v1088 = vadd.f32 0.0, %v1087
        %v1089 = vpop.f32.mrf.mxu0
        %1090 = vmatprep.mubr.f32.mxu0 0.0
        %1091 = vmatmul.mubr.f32.gmra.mxu0 %v292
        %v1092 = vpop.f32.mrf.mxu0
        %v1093 = vadd.f32 0.0, %v1092
        %v1094 = vpop.f32.mrf.mxu0
        %1095 = vdwg.mxu0
        %v1096 = vmul.f32 %v1058, %v1058
        %v1097 = vmul.f32 %v1063, %v1063
        %v1098 = vmul.f32 %v1068, %v1068
        %v1099 = vmul.f32 %v1073, %v1073
        %v1100 = vmul.f32 %v1078, %v1078
        %v1101 = vmul.f32 %v1083, %v1083
        %v1102 = vmul.f32 %v1088, %v1088
        %v1103 = vmul.f32 %v1093, %v1093
        %v1104 = vadd.f32 %v862, %v1096
        %v1105 = vadd.f32 %v863, %v1097
        %v1106 = vadd.f32 %v864, %v1098
        %v1107 = vadd.f32 %v865, %v1099
        %v1108 = vadd.f32 %v866, %v1100
        %v1109 = vadd.f32 %v867, %v1101
        %v1110 = vadd.f32 %v868, %v1102
        %v1111 = vadd.f32 %v869, %v1103
        %v1112 = vadd.f32 %v1104, %v1105
        %v1113 = vadd.f32 %v1112, %v1106
        %v1114 = vadd.f32 %v1113, %v1107
        %v1115 = vadd.f32 %v1114, %v1108
        %v1116 = vadd.f32 %v1115, %v1109
        %v1117 = vadd.f32 %v1116, %v1110
        %v1118 = vadd.f32 %v1117, %v1111
        %1119 = vadd.xlane.f32.xlu0 %v1118
        %v1120 = vpop.xlane.xlu0 %1119
        %v1121 = vrot.slane %v1120, 4
        %v1122 = vadd.f32 %v1120, %v1121
        %v1123 = vrot.slane %v1122, 2
        %v1124 = vadd.f32 %v1122, %v1123
        %v1125 = vrot.slane %v1124, 1
        %v1126 = vadd.f32 %v1124, %v1125
        %s1127 = vtos %v1126
        %v1128 = vadd.f32 %v983, %v984
        %v1129 = vadd.f32 %v1128, %v985
        %v1130 = vadd.f32 %v1129, %v986
        %v1131 = vadd.f32 %v1130, %v987
        %v1132 = vadd.f32 %v1131, %v988
        %v1133 = vadd.f32 %v1132, %v989
        %v1134 = vadd.f32 %v1133, %v990
        %1135 = vadd.xlane.f32.xlu0 %v1134
        %v1136 = vpop.xlane.xlu0 %1135
        %v1137 = vrot.slane %v1136, 4
        %v1138 = vadd.f32 %v1136, %v1137
        %v1139 = vrot.slane %v1138, 2
        %v1140 = vadd.f32 %v1138, %v1139
        %v1141 = vrot.slane %v1140, 1
        %v1142 = vadd.f32 %v1140, %v1141
        %s1143 = vtos %v1142
        %s1144 = smul.f32 %s1143, 2.0
        %s1145 = sadd.f32 %s1127, %s1144
        %v1146 = vstv %s1145
        %1147 = vst [vmem:[%s284] sm:$0xff] %v1146
        %s1148 = sand.u32 %s163, 1
        %s1149 = scalar_lea.sflag [#allocation4], %s1148
        %s1150 = sand.u32 %s163, 1
        %s1151 = smul.addr %s1150, 8
        %s1152 = scalar_lea.vmem [#allocation7], %s1151
        // Predicated region
        $region53: #{tpu_custom_call.1} parent=43 // pred_check
          %p1153 = pneg %p173
        $region54: #{tpu_custom_call.1} parent=43 // pred_check_branch
          %1155 = sbr.rel (%p1153) target = $region56
        $region55: #{tpu_custom_call.1} parent=43 // pred_region
          %s1157 = ssub.s32 128, 128
          %1158 = vsyncadd %s1149, %s1157
          %s1159 = smul.addr %s24, 128
          %s1160 = scalar_lea.hbm %s6, %s1159
          %s1162 = sshll.u32 %s1152, 4
          %s1163 = int_to_ptr.vmem [resolvable:$true] %s1162
          %1165 = dma.vmem_to_hbm [thread:$0]  %s1163, 128, %s1160, %s1149
        $region56: #{tpu_custom_call.1} parent=43 // pred_fallthru
          _
      $region44: #{tpu_custom_call.1} parent=5 // pred_fallthru
        _
      %p1166 = scmp.le.s32.totalorder 2, %s19
      // Predicated region
      $region57: #{tpu_custom_call.1} parent=5 // pred_check
        %p1167 = pneg %p1166
      $region58: #{tpu_custom_call.1} parent=5 // pred_check_branch
        %1169 = sbr.rel (%p1167) target = $region60
      $region59: #{tpu_custom_call.1} parent=5 // pred_region
        %s1170 = ssub.s32 %s19, 2
        // Predicated region
        $region61: #{tpu_custom_call.1} parent=59 // pred_check
          %p1171 = pneg %p179
        $region62: #{tpu_custom_call.1} parent=59 // pred_check_branch
          %1173 = sbr.rel (%p1171) target = $region64
        $region63: #{tpu_custom_call.1} parent=59 // pred_region
          %s1174 = sand.u32 %s164, 1
          %s1175 = scalar_lea.sflag [#allocation4], %s1174
          %s1176 = sand.u32 %s164, 1
          %s1177 = smul.addr %s1176, 8
          %s1178 = scalar_lea.vmem [#allocation7], %s1177
          %1179 = dma.done %s1175, 128
        $region64: #{tpu_custom_call.1} parent=59 // pred_fallthru
          _
      $region60: #{tpu_custom_call.1} parent=5 // pred_fallthru
        _
    $region6: #{tpu_custom_call.1} parent=1 // loop_footer
      %s23 = sadd.s32 1, %s19
    $region7: #{tpu_custom_call.1} parent=1 // loop_footer_branch
      %18 = sbr.rel target = $region3
    $region8: #{tpu_custom_call.1} parent=1 // loop_exit
      _
    %1180 = vsyncpa [#allocation3], 1
    %s1181 = scalar_lea.sflag [#allocation3], 1
    %1182 = vsyncpa %s1181, 1
    %1183 = vsyncpa [#allocation6], 1
    %1184 = vsyncpa [#allocation4], 1
    %s1185 = scalar_lea.sflag [#allocation4], 1
    %1186 = vsyncpa %s1185, 1

</llo_original>
